<compile_context>
chip_gen: v7x
topology: tpu7x:2x2x1
jax: 0.10.0
libtpu: 0.0.40
codegen_flags: <defaults>
</compile_context>

<pallas_src>
import jax
import jax.numpy as jnp
from jax.experimental import pallas as pl
from jax.experimental.pallas import tpu as pltpu


def _round_up(x, m):
    return ((x + m - 1) // m) * m


def mlp_kernel(x_ref, w1_ref, b1_ref, w2_ref, b2_ref, out_ref):
    # x_ref:  (tm, D)   f32      w1_ref: (D, Hd)   bf16    b1_ref: (1, Hd)  f32
    # w2_ref: (Hd, Op)  bf16     b2_ref: (1, Op)   f32     out_ref: (tm, Op) bf16
    x = x_ref[...].astype(jnp.bfloat16)                  # in-kernel cast (free VPU filler)
    h = jnp.dot(x, w1_ref[...], preferred_element_type=jnp.float32)
    h = jnp.maximum(h + b1_ref[...], 0.0)                # bias + ReLU in f32 on the VPU
    out = jnp.dot(h.astype(jnp.bfloat16), w2_ref[...],
                  preferred_element_type=jnp.float32)
    out_ref[...] = (out + b2_ref[...]).astype(out_ref.dtype)   # bf16 store (lane-dense)


def mnist_model1_forward(xb, w1, b1, w2, b2, *, max_batch_tile=512):
    """xb: (B, C, H, W) float32. w1: (D, Hd), b1: (1, Hd), w2: (Hd, O), b2: (1, O).
    Returns logits (B, O) float32 (bf16 matmul precision, f32 accumulation)."""
    B = xb.shape[0]
    x2d = xb.reshape(B, -1)                              # == xb.view(xb.size(0), -1)
    D = x2d.shape[1]
    Hd = w1.shape[1]
    O = w2.shape[1]
    O_pad = _round_up(max(O, 128), 128)                  # lane-dense padded output

    # bf16 weights for the MXU; biases stay f32; x stays f32 (cast in-kernel).
    w1_bf = w1.astype(jnp.bfloat16)
    w2_bf = jnp.pad(w2.astype(jnp.bfloat16), ((0, 0), (0, O_pad - O)))
    b1_f = b1.reshape(1, Hd).astype(jnp.float32)
    b2_f = jnp.pad(b2.reshape(1, O).astype(jnp.float32), ((0, 0), (0, O_pad - O)))

    # Batch tiling: tm multiple of 16 (covers f32-in / bf16-out sublane rules),
    # capped at max_batch_tile. For B >= 32 force >= 2 tiles so the batch axis
    # can be sharded across TensorCores on v7x.
    tm = min(max_batch_tile, _round_up(B, 16))
    if B >= 32:
        tm = min(tm, _round_up((B + 1) // 2, 16))
    num_tiles = pl.cdiv(B, tm)

    flops = 2 * B * D * Hd + 2 * B * Hd * O_pad
    bytes_accessed = (B * D * 4 + w1_bf.size * 2 + w2_bf.size * 2
                      + b1_f.size * 4 + b2_f.size * 4 + B * O_pad * 2)
    cost = pl.CostEstimate(flops=flops, transcendentals=0,
                           bytes_accessed=bytes_accessed)

    if num_tiles == 1:
        # Small batch (< 32): one VMEM-resident block per operand, no grid loop,
        # no batch padding at all.
        out_padded = pl.pallas_call(
            mlp_kernel,
            out_shape=jax.ShapeDtypeStruct((B, O_pad), jnp.bfloat16),
            in_specs=[pl.BlockSpec(memory_space=pltpu.MemorySpace.VMEM)] * 5,
            out_specs=pl.BlockSpec(memory_space=pltpu.MemorySpace.VMEM),
            cost_estimate=cost,
        )(x2d, w1_bf, b1_f, w2_bf, b2_f)
    else:
        B_pad = num_tiles * tm
        x_in = jnp.pad(x2d, ((0, B_pad - B), (0, 0))) if B_pad != B else x2d
        # Activations/outputs pipelined per batch tile; weights/biases stay
        # VMEM-resident (constant index_map -> no re-DMA across grid steps).
        out_padded = pl.pallas_call(
            mlp_kernel,
            out_shape=jax.ShapeDtypeStruct((B_pad, O_pad), jnp.bfloat16),
            grid=(num_tiles,),
            in_specs=[
                pl.BlockSpec((tm, D), lambda i: (i, 0)),
                pl.BlockSpec((D, Hd), lambda i: (0, 0)),
                pl.BlockSpec((1, Hd), lambda i: (0, 0)),
                pl.BlockSpec((Hd, O_pad), lambda i: (0, 0)),
                pl.BlockSpec((1, O_pad), lambda i: (0, 0)),
            ],
            out_specs=pl.BlockSpec((tm, O_pad), lambda i: (i, 0)),
            compiler_params=pltpu.CompilerParams(
                dimension_semantics=("parallel",)),
            cost_estimate=cost,
        )(x_in, w1_bf, b1_f, w2_bf, b2_f)

    return out_padded[:B, :O].astype(jnp.float32)


def init_linear_params(key, fan_in, fan_out):
    # Mimic nn.Linear default init: U(-1/sqrt(fan_in), 1/sqrt(fan_in)).
    kw, kb = jax.random.split(key)
    bound = 1.0 / jnp.sqrt(fan_in)
    # Stored as (fan_in, fan_out) so the kernel computes x @ W (== x @ W_pt.T).
    w = jax.random.uniform(kw, (fan_in, fan_out), jnp.float32, -bound, bound)
    b = jax.random.uniform(kb, (1, fan_out), jnp.float32, -bound, bound)
    return w, b


if __name__ == "__main__":
    # Small MNIST-like shapes: batch=8, 1x16x16 images -> input_size=256,
    # hidden_size=128, output_size=10 classes.
    B, C, H, W = 8, 1, 16, 16
    input_size = C * H * W
    hidden_size = 128
    output_size = 10

    key = jax.random.PRNGKey(0)
    kx, k1, k2 = jax.random.split(key, 3)

    xb = jax.random.normal(kx, (B, C, H, W), jnp.float32)
    w1, b1 = init_linear_params(k1, input_size, hidden_size)
    w2, b2 = init_linear_params(k2, hidden_size, output_size)

    out = mnist_model1_forward(xb, w1, b1, w2, b2)
    out = jax.block_until_ready(out)

    # References: one with the same bf16 cast points as the kernel (tight check,
    # including the final bf16 store), and one in full f32 (loose semantic check).
    x2d = xb.reshape(B, -1)
    h_bf = jnp.maximum(
        jnp.dot(x2d.astype(jnp.bfloat16), w1.astype(jnp.bfloat16),
                preferred_element_type=jnp.float32) + b1, 0.0)
    ref_bf = (jnp.dot(h_bf.astype(jnp.bfloat16), w2.astype(jnp.bfloat16),
                      preferred_element_type=jnp.float32) + b2)
    ref_bf = ref_bf.astype(jnp.bfloat16).astype(jnp.float32)
    ref_f32 = jnp.maximum(x2d @ w1 + b1, 0.0) @ w2 + b2

    assert out.shape == (B, output_size)
    assert jnp.allclose(out, ref_bf, atol=1e-2, rtol=1e-2), "mismatch vs bf16 reference"
    assert jnp.allclose(out, ref_f32, atol=5e-2, rtol=5e-2), "mismatch vs f32 reference"

    print("KERNEL_OK")
</pallas_src>

<mosaic_0001>
module attributes {stable_mosaic.version = 11 : i64} {
  func.func @mlp_kernel(%arg0: memref<8x256xf32, #tpu.memory_space<vmem>>, %arg1: memref<256x128xbf16, #tpu.memory_space<vmem>>, %arg2: memref<1x128xf32, #tpu.memory_space<vmem>>, %arg3: memref<128x128xbf16, #tpu.memory_space<vmem>>, %arg4: memref<1x128xf32, #tpu.memory_space<vmem>>, %arg5: memref<8x128xbf16, #tpu.memory_space<vmem>>) attributes {dimension_semantics = [], scalar_prefetch = 0 : i64, scratch_operands = 0 : i64, tpu.core_type = #tpu.core_type<tc>} {
    %c0 = arith.constant 0 : index
    %c0_0 = arith.constant 0 : index
    %0 = vector.load %arg0[%c0, %c0_0] : memref<8x256xf32, #tpu.memory_space<vmem>>, vector<8x256xf32>
    %1 = arith.truncf %0 : vector<8x256xf32> to vector<8x256xbf16>
    %c0_1 = arith.constant 0 : index
    %c0_2 = arith.constant 0 : index
    %2 = vector.load %arg1[%c0_1, %c0_2] : memref<256x128xbf16, #tpu.memory_space<vmem>>, vector<256x128xbf16>
    %cst = arith.constant dense<0.000000e+00> : vector<8x128xf32>
    %3 = tpu.matmul %1, %2, %cst {dimension_numbers = #tpu.dot_dimension_numbers<[1], [0], [0], [1], [0, 0, 1, 1], [], []>} : vector<8x256xbf16>, vector<256x128xbf16>, vector<8x128xf32> -> vector<8x128xf32>
    %c0_3 = arith.constant 0 : index
    %c0_4 = arith.constant 0 : index
    %4 = vector.load %arg2[%c0_3, %c0_4] : memref<1x128xf32, #tpu.memory_space<vmem>>, vector<1x128xf32>
    %5 = vector.broadcast %4 : vector<1x128xf32> to vector<8x128xf32>
    %6 = arith.addf %3, %5 : vector<8x128xf32>
    %cst_5 = arith.constant 0.000000e+00 : f32
    %7 = vector.broadcast %cst_5 : f32 to vector<8x128xf32>
    %8 = arith.maximumf %6, %7 : vector<8x128xf32>
    %9 = arith.truncf %8 : vector<8x128xf32> to vector<8x128xbf16>
    %c0_6 = arith.constant 0 : index
    %c0_7 = arith.constant 0 : index
    %10 = vector.load %arg3[%c0_6, %c0_7] : memref<128x128xbf16, #tpu.memory_space<vmem>>, vector<128x128xbf16>
    %cst_8 = arith.constant dense<0.000000e+00> : vector<8x128xf32>
    %11 = tpu.matmul %9, %10, %cst_8 {dimension_numbers = #tpu.dot_dimension_numbers<[1], [0], [0], [1], [0, 0, 1, 1], [], []>} : vector<8x128xbf16>, vector<128x128xbf16>, vector<8x128xf32> -> vector<8x128xf32>
    %c0_9 = arith.constant 0 : index
    %c0_10 = arith.constant 0 : index
    %12 = vector.load %arg4[%c0_9, %c0_10] : memref<1x128xf32, #tpu.memory_space<vmem>>, vector<1x128xf32>
    %13 = vector.broadcast %12 : vector<1x128xf32> to vector<8x128xf32>
    %14 = arith.addf %11, %13 : vector<8x128xf32>
    %15 = arith.truncf %14 : vector<8x128xf32> to vector<8x128xbf16>
    %c0_11 = arith.constant 0 : index
    %c0_12 = arith.constant 0 : index
    %16 = vector.load %arg5[%c0_11, %c0_12] : memref<8x128xbf16, #tpu.memory_space<vmem>>, vector<8x128xbf16>
    tpu.vector_store %arg5[%c0_11, %c0_12], %15 {strides = array<i32>} : memref<8x128xbf16, #tpu.memory_space<vmem>>, vector<8x128xbf16>,
    return
  }
}

</mosaic_0001>

<llo_original>
// kernel: tpu_custom_call.1
$region0: #{tpu_custom_call.1}
  #allocation0 [shape = 'u32[]', space=smem, size = 0x4, offset = 0x4, fixed_abs, tag = 'smem constant byte address 0x4 - core index']
  #allocation1 [shape = 'u32[144,128]{1,0:T(1,128)}', space=vmem, size = 0x12000, scoped, tag = 'internal scratch']
  %s0 = inlined_call_operand.hbm [shape: f32[8,256], index: 0, kind: input, shape index: {}]
  %s1 = inlined_call_operand.hbm [shape: bf16[256,128], index: 1, kind: input, shape index: {}]
  %s2 = inlined_call_operand.vmem [shape: f32[1,128], index: 2, kind: input, shape index: {}]
  %s3 = inlined_call_operand.hbm [shape: bf16[128,128], index: 3, kind: input, shape index: {}]
  %s4 = inlined_call_operand.vmem [shape: f32[1,128], index: 4, kind: input, shape index: {}]
  %s5 = inlined_call_operand.hbm [shape: bf16[8,128], index: 5, kind: output, shape index: {}]
  %s6 = sld [smem:[#allocation0]]
  $region42: #{tpu_custom_call.1} parent=0
    _
  %s8 = ssub.s32 1, %s6
  %s9 = scalar_select 0, %s8, %s6
  $region1: #{tpu_custom_call.1} parent=0
    #allocation2 [shape = 'u8[8192]{0}', space=vmem, size = 0x2000, scoped, tag = 'input window, operand 0, single buffered']
    #allocation3 [shape = 's32[1]{0}', space=sflag, size = 0x4, scoped, tag = 'scoped memory for tpu_custom_call.1']
    #allocation4 [shape = 's32[1]{0}', space=sflag, size = 0x4, scoped, tag = 'scoped memory for tpu_custom_call.1']
    #allocation5 [shape = 'u8[65536]{0}', space=vmem, size = 0x10000, scoped, tag = 'input window, operand 1, single buffered']
    #allocation6 [shape = 's32[1]{0}', space=sflag, size = 0x4, scoped, tag = 'scoped memory for tpu_custom_call.1']
    #allocation7 [shape = 'u8[32768]{0}', space=vmem, size = 0x8000, scoped, tag = 'input window, operand 3, single buffered']
    #allocation8 [shape = 'u8[2048]{0}', space=vmem, size = 0x800, scoped, tag = 'output window, operand 0, single buffered']
    %10 = vsyncpa [#allocation3], 0
    %11 = vsyncpa [#allocation6], 0
    %12 = vsyncpa [#allocation4], 0
    // Predicated region
    $region2: #{tpu_custom_call.1} parent=1 // pred_check
      _
    $region3: #{tpu_custom_call.1} parent=1 // pred_check_branch
      %14 = sbr.rel (0) target = $region5
    $region4: #{tpu_custom_call.1} parent=1 // pred_region
      %s16 = ssub.s32 256, 256
      %17 = vsyncadd [#allocation3], %s16
      %s19 = sshll.u32 [#allocation2], 4
      %s20 = int_to_ptr.vmem [resolvable:$true] %s19
      %22 = dma.hbm_to_vmem [thread:$0]  %s0, 256, %s20, [#allocation3]
    $region5: #{tpu_custom_call.1} parent=1 // pred_fallthru
      _
    // Predicated region
    $region6: #{tpu_custom_call.1} parent=1 // pred_check
      _
    $region7: #{tpu_custom_call.1} parent=1 // pred_check_branch
      %24 = sbr.rel (0) target = $region9
    $region8: #{tpu_custom_call.1} parent=1 // pred_region
      %s26 = ssub.s32 2048, 2048
      %27 = vsyncadd [#allocation6], %s26
      %s28 = sshll.u32 [#allocation5], 4
      %s29 = int_to_ptr.vmem [resolvable:$true] %s28
      %34 = dma.hbm_to_vmem [thread:$0]  %s1, 2048, %s29, [#allocation6], 64, 64, 4
    $region9: #{tpu_custom_call.1} parent=1 // pred_fallthru
      _
    // Predicated region
    $region10: #{tpu_custom_call.1} parent=1 // pred_check
      _
    $region11: #{tpu_custom_call.1} parent=1 // pred_check_branch
      %36 = sbr.rel (0) target = $region13
    $region12: #{tpu_custom_call.1} parent=1 // pred_region
      _
    $region13: #{tpu_custom_call.1} parent=1 // pred_fallthru
      _
    // Predicated region
    $region14: #{tpu_custom_call.1} parent=1 // pred_check
      _
    $region15: #{tpu_custom_call.1} parent=1 // pred_check_branch
      %38 = sbr.rel (0) target = $region17
    $region16: #{tpu_custom_call.1} parent=1 // pred_region
      %s40 = ssub.s32 1024, 1024
      %41 = vsyncadd [#allocation6], %s40
      %s42 = sshll.u32 [#allocation7], 4
      %s43 = int_to_ptr.vmem [resolvable:$true] %s42
      %48 = dma.hbm_to_vmem [thread:$0]  %s3, 1024, %s43, [#allocation6], 64, 64, 4
    $region17: #{tpu_custom_call.1} parent=1 // pred_fallthru
      _
    // Predicated region
    $region18: #{tpu_custom_call.1} parent=1 // pred_check
      _
    $region19: #{tpu_custom_call.1} parent=1 // pred_check_branch
      %50 = sbr.rel (0) target = $region21
    $region20: #{tpu_custom_call.1} parent=1 // pred_region
      _
    $region21: #{tpu_custom_call.1} parent=1 // pred_fallthru
      _
    // Predicated region
    $region22: #{tpu_custom_call.1} parent=1 // pred_check
      _
    $region23: #{tpu_custom_call.1} parent=1 // pred_check_branch
      %52 = sbr.rel (0) target = $region25
    $region24: #{tpu_custom_call.1} parent=1 // pred_region
      %53 = dma.done [#allocation3], 256
    $region25: #{tpu_custom_call.1} parent=1 // pred_fallthru
      _
    // Predicated region
    $region26: #{tpu_custom_call.1} parent=1 // pred_check
      _
    $region27: #{tpu_custom_call.1} parent=1 // pred_check_branch
      %55 = sbr.rel (0) target = $region29
    $region28: #{tpu_custom_call.1} parent=1 // pred_region
      %56 = dma.done [#allocation6], 2048
    $region29: #{tpu_custom_call.1} parent=1 // pred_fallthru
      _
    // Predicated region
    $region30: #{tpu_custom_call.1} parent=1 // pred_check
      _
    $region31: #{tpu_custom_call.1} parent=1 // pred_check_branch
      %58 = sbr.rel (0) target = $region33
    $region32: #{tpu_custom_call.1} parent=1 // pred_region
      %59 = dma.done [#allocation6], 1024
    $region33: #{tpu_custom_call.1} parent=1 // pred_fallthru
      _
    %v61 = vld [vmem:[#allocation2] sm:$0xff]
    %v62 = vld [vmem:[#allocation2 + $0x8] sm:$0xff]
    %v63 = vpack.c.bf16 %v61, %v61
    %v64 = vpack.c.bf16 %v62, %v62
    %v65 = vld [vmem:[#allocation5] sm:$0xf]
    %v66 = vld [vmem:[#allocation5 + $0x4] sm:$0xf]
    %v67 = vld [vmem:[#allocation5 + $0x8] sm:$0xf]
    %v68 = vld [vmem:[#allocation5 + $0xc] sm:$0xf]
    %v69 = vld [vmem:[#allocation5 + $0x10] sm:$0xf]
    %v70 = vld [vmem:[#allocation5 + $0x14] sm:$0xf]
    %v71 = vld [vmem:[#allocation5 + $0x18] sm:$0xf]
    %v72 = vld [vmem:[#allocation5 + $0x1c] sm:$0xf]
    %v73 = vld [vmem:[#allocation5 + $0x20] sm:$0xf]
    %v74 = vld [vmem:[#allocation5 + $0x24] sm:$0xf]
    %v75 = vld [vmem:[#allocation5 + $0x28] sm:$0xf]
    %v76 = vld [vmem:[#allocation5 + $0x2c] sm:$0xf]
    %v77 = vld [vmem:[#allocation5 + $0x30] sm:$0xf]
    %v78 = vld [vmem:[#allocation5 + $0x34] sm:$0xf]
    %v79 = vld [vmem:[#allocation5 + $0x38] sm:$0xf]
    %v80 = vld [vmem:[#allocation5 + $0x3c] sm:$0xf]
    %v81 = vld [vmem:[#allocation5 + $0x40] sm:$0xf]
    %v82 = vld [vmem:[#allocation5 + $0x44] sm:$0xf]
    %v83 = vld [vmem:[#allocation5 + $0x48] sm:$0xf]
    %v84 = vld [vmem:[#allocation5 + $0x4c] sm:$0xf]
    %v85 = vld [vmem:[#allocation5 + $0x50] sm:$0xf]
    %v86 = vld [vmem:[#allocation5 + $0x54] sm:$0xf]
    %v87 = vld [vmem:[#allocation5 + $0x58] sm:$0xf]
    %v88 = vld [vmem:[#allocation5 + $0x5c] sm:$0xf]
    %v89 = vld [vmem:[#allocation5 + $0x60] sm:$0xf]
    %v90 = vld [vmem:[#allocation5 + $0x64] sm:$0xf]
    %v91 = vld [vmem:[#allocation5 + $0x68] sm:$0xf]
    %v92 = vld [vmem:[#allocation5 + $0x6c] sm:$0xf]
    %v93 = vld [vmem:[#allocation5 + $0x70] sm:$0xf]
    %v94 = vld [vmem:[#allocation5 + $0x74] sm:$0xf]
    %v95 = vld [vmem:[#allocation5 + $0x78] sm:$0xf]
    %v96 = vld [vmem:[#allocation5 + $0x7c] sm:$0xf]
    %v97 = vld [vmem:[%s2] sm:$0x1]
    %v99 = vlaneseq
    %v100 = vshrl.u32 %v99, 7
    %v101 = vsub.s32 0, %v100
    %v102 = vrot.slane %v97, %v101
    %v136 = vunpack.c.l.b16 %v65
    %v137 = vunpack.c.l.b16 %v66
    %v138 = vunpack.c.l.b16 %v67
    %v139 = vunpack.c.l.b16 %v68
    %v140 = vunpack.c.l.b16 %v69
    %v141 = vunpack.c.l.b16 %v70
    %v142 = vunpack.c.l.b16 %v71
    %v143 = vunpack.c.l.b16 %v72
    %v144 = vunpack.c.l.b16 %v73
    %v145 = vunpack.c.l.b16 %v74
    %v146 = vunpack.c.l.b16 %v75
    %v147 = vunpack.c.l.b16 %v76
    %v148 = vunpack.c.l.b16 %v77
    %v149 = vunpack.c.l.b16 %v78
    %v150 = vunpack.c.l.b16 %v79
    %v151 = vunpack.c.l.b16 %v80
    %v152 = vunpack.c.l.b16 %v81
    %v153 = vunpack.c.l.b16 %v82
    %v154 = vunpack.c.l.b16 %v83
    %v155 = vunpack.c.l.b16 %v84
    %v156 = vunpack.c.l.b16 %v85
    %v157 = vunpack.c.l.b16 %v86
    %v158 = vunpack.c.l.b16 %v87
    %v159 = vunpack.c.l.b16 %v88
    %v160 = vunpack.c.l.b16 %v89
    %v161 = vunpack.c.l.b16 %v90
    %v162 = vunpack.c.l.b16 %v91
    %v163 = vunpack.c.l.b16 %v92
    %v164 = vunpack.c.l.b16 %v93
    %v165 = vunpack.c.l.b16 %v94
    %v166 = vunpack.c.l.b16 %v95
    %v167 = vunpack.c.l.b16 %v96
    %v168 = vpack.c.b16 %v137, %v136
    %v169 = vpack.c.b16 %v139, %v138
    %v170 = vpack.c.b16 %v141, %v140
    %v171 = vpack.c.b16 %v143, %v142
    %v172 = vpack.c.b16 %v145, %v144
    %v173 = vpack.c.b16 %v147, %v146
    %v174 = vpack.c.b16 %v149, %v148
    %v175 = vpack.c.b16 %v151, %v150
    %v176 = vpack.c.b16 %v153, %v152
    %v177 = vpack.c.b16 %v155, %v154
    %v178 = vpack.c.b16 %v157, %v156
    %v179 = vpack.c.b16 %v159, %v158
    %v180 = vpack.c.b16 %v161, %v160
    %v181 = vpack.c.b16 %v163, %v162
    %v182 = vpack.c.b16 %v165, %v164
    %v183 = vpack.c.b16 %v167, %v166
    %200 = vmatprep.subr.bf16.mxu0 0
    %201 = vmatpush1.bf16.msra.mxu0 %v168
    %202 = vmatprep.subr.bf16.mxu0 0
    %203 = vmatpush1.bf16.msra.mxu0 %v169
    %204 = vmatprep.subr.bf16.mxu0 0
    %205 = vmatpush1.bf16.msra.mxu0 %v170
    %206 = vmatprep.subr.bf16.mxu0 0
    %207 = vmatpush1.bf16.msra.mxu0 %v171
    %208 = vmatprep.subr.bf16.mxu0 0
    %209 = vmatpush1.bf16.msra.mxu0 %v172
    %210 = vmatprep.subr.bf16.mxu0 0
    %211 = vmatpush1.bf16.msra.mxu0 %v173
    %212 = vmatprep.subr.bf16.mxu0 0
    %213 = vmatpush1.bf16.msra.mxu0 %v174
    %214 = vmatprep.subr.bf16.mxu0 0
    %215 = vmatpush1.bf16.msra.mxu0 %v175
    %216 = vmatprep.subr.bf16.mxu0 0
    %217 = vmatpush1.bf16.msra.mxu0 %v176
    %218 = vmatprep.subr.bf16.mxu0 0
    %219 = vmatpush1.bf16.msra.mxu0 %v177
    %220 = vmatprep.subr.bf16.mxu0 0
    %221 = vmatpush1.bf16.msra.mxu0 %v178
    %222 = vmatprep.subr.bf16.mxu0 0
    %223 = vmatpush1.bf16.msra.mxu0 %v179
    %224 = vmatprep.subr.bf16.mxu0 0
    %225 = vmatpush1.bf16.msra.mxu0 %v180
    %226 = vmatprep.subr.bf16.mxu0 0
    %227 = vmatpush1.bf16.msra.mxu0 %v181
    %228 = vmatprep.subr.bf16.mxu0 0
    %229 = vmatpush1.bf16.msra.mxu0 %v182
    %230 = vmatprep.subr.bf16.mxu0 0
    %231 = vmatpush1.bf16.msra.mxu0 %v183
    %232 = vmatprep.mubr.bf16.mxu0 %v64
    %233 = vmatmul.mubr.bf16.gmra.mrb[0].mxu0 %v63
    %v234 = vpop.f32.mrb[0].mxu0
    %v235 = vadd.f32 %v102, %v234
    %v236 = vpop.f32.mrb[0].mxu0
    %v237 = vpop.f32.mrb[0].mxu0
    %v238 = vpop.f32.mrb[0].mxu0
    %239 = vdwg.mxu0
    %v240 = vmax.f32 %v235, 0.0
    %v241 = vpack.c.bf16 %v240, %v240
    %v242 = vld [vmem:[#allocation7] sm:$0xf]
    %v243 = vld [vmem:[#allocation7 + $0x4] sm:$0xf]
    %v244 = vld [vmem:[#allocation7 + $0x8] sm:$0xf]
    %v245 = vld [vmem:[#allocation7 + $0xc] sm:$0xf]
    %v246 = vld [vmem:[#allocation7 + $0x10] sm:$0xf]
    %v247 = vld [vmem:[#allocation7 + $0x14] sm:$0xf]
    %v248 = vld [vmem:[#allocation7 + $0x18] sm:$0xf]
    %v249 = vld [vmem:[#allocation7 + $0x1c] sm:$0xf]
    %v250 = vld [vmem:[#allocation7 + $0x20] sm:$0xf]
    %v251 = vld [vmem:[#allocation7 + $0x24] sm:$0xf]
    %v252 = vld [vmem:[#allocation7 + $0x28] sm:$0xf]
    %v253 = vld [vmem:[#allocation7 + $0x2c] sm:$0xf]
    %v254 = vld [vmem:[#allocation7 + $0x30] sm:$0xf]
    %v255 = vld [vmem:[#allocation7 + $0x34] sm:$0xf]
    %v256 = vld [vmem:[#allocation7 + $0x38] sm:$0xf]
    %v257 = vld [vmem:[#allocation7 + $0x3c] sm:$0xf]
    %v258 = vld [vmem:[%s4] sm:$0x1]
    %v260 = vlaneseq
    %v261 = vshrl.u32 %v260, 7
    %v262 = vsub.s32 0, %v261
    %v263 = vrot.slane %v258, %v262
    %v281 = vunpack.c.l.b16 %v242
    %v282 = vunpack.c.l.b16 %v243
    %v283 = vunpack.c.l.b16 %v244
    %v284 = vunpack.c.l.b16 %v245
    %v285 = vunpack.c.l.b16 %v246
    %v286 = vunpack.c.l.b16 %v247
    %v287 = vunpack.c.l.b16 %v248
    %v288 = vunpack.c.l.b16 %v249
    %v289 = vunpack.c.l.b16 %v250
    %v290 = vunpack.c.l.b16 %v251
    %v291 = vunpack.c.l.b16 %v252
    %v292 = vunpack.c.l.b16 %v253
    %v293 = vunpack.c.l.b16 %v254
    %v294 = vunpack.c.l.b16 %v255
    %v295 = vunpack.c.l.b16 %v256
    %v296 = vunpack.c.l.b16 %v257
    %v297 = vpack.c.b16 %v282, %v281
    %v298 = vpack.c.b16 %v284, %v283
    %v299 = vpack.c.b16 %v286, %v285
    %v300 = vpack.c.b16 %v288, %v287
    %v301 = vpack.c.b16 %v290, %v289
    %v302 = vpack.c.b16 %v292, %v291
    %v303 = vpack.c.b16 %v294, %v293
    %v304 = vpack.c.b16 %v296, %v295
    %313 = vmatprep.subr.bf16.mxu0 0
    %314 = vmatpush1.bf16.msra.mxu0 %v297
    %315 = vmatprep.subr.bf16.mxu0 0
    %316 = vmatpush1.bf16.msra.mxu0 %v298
    %317 = vmatprep.subr.bf16.mxu0 0
    %318 = vmatpush1.bf16.msra.mxu0 %v299
    %319 = vmatprep.subr.bf16.mxu0 0
    %320 = vmatpush1.bf16.msra.mxu0 %v300
    %321 = vmatprep.subr.bf16.mxu0 0
    %322 = vmatpush1.bf16.msra.mxu0 %v301
    %323 = vmatprep.subr.bf16.mxu0 0
    %324 = vmatpush1.bf16.msra.mxu0 %v302
    %325 = vmatprep.subr.bf16.mxu0 0
    %326 = vmatpush1.bf16.msra.mxu0 %v303
    %327 = vmatprep.subr.bf16.mxu0 0
    %328 = vmatpush1.bf16.msra.mxu0 %v304
    %329 = vmatprep.subr.bf16.mxu0 0
    %330 = vmatpush1.bf16.msra.mxu0 0
    %331 = vmatprep.subr.bf16.mxu0 0
    %332 = vmatpush1.bf16.msra.mxu0 0
    %333 = vmatprep.subr.bf16.mxu0 0
    %334 = vmatpush1.bf16.msra.mxu0 0
    %335 = vmatprep.subr.bf16.mxu0 0
    %336 = vmatpush1.bf16.msra.mxu0 0
    %337 = vmatprep.subr.bf16.mxu0 0
    %338 = vmatpush1.bf16.msra.mxu0 0
    %339 = vmatprep.subr.bf16.mxu0 0
    %340 = vmatpush1.bf16.msra.mxu0 0
    %341 = vmatprep.subr.bf16.mxu0 0
    %342 = vmatpush1.bf16.msra.mxu0 0
    %343 = vmatprep.subr.bf16.mxu0 0
    %344 = vmatpush1.bf16.msra.mxu0 0
    %345 = vmatprep.mubr.bf16.mxu0 0
    %346 = vmatmul.mubr.bf16.gmra.mrb[0].mxu0 %v241
    %v347 = vpop.f32.mrb[0].mxu0
    %v348 = vadd.f32 %v263, %v347
    %v349 = vpop.f32.mrb[0].mxu0
    %v350 = vpop.f32.mrb[0].mxu0
    %v351 = vpop.f32.mrb[0].mxu0
    %352 = vdwg.mxu0
    %v353 = vpack.c.bf16 %v348, %v348
    %354 = vst [vmem:[#allocation8] sm:$0xf] %v353
    // Predicated region
    $region34: #{tpu_custom_call.1} parent=1 // pred_check
      _
    $region35: #{tpu_custom_call.1} parent=1 // pred_check_branch
      %356 = sbr.rel (0) target = $region37
    $region36: #{tpu_custom_call.1} parent=1 // pred_region
      %s358 = ssub.s32 64, 64
      %359 = vsyncadd [#allocation4], %s358
      %s361 = sshll.u32 [#allocation8], 4
      %s362 = int_to_ptr.vmem [resolvable:$true] %s361
      %364 = dma.vmem_to_hbm [thread:$0]  %s362, 64, %s5, [#allocation4]
    $region37: #{tpu_custom_call.1} parent=1 // pred_fallthru
      _
    // Predicated region
    $region38: #{tpu_custom_call.1} parent=1 // pred_check
      _
    $region39: #{tpu_custom_call.1} parent=1 // pred_check_branch
      %366 = sbr.rel (0) target = $region41
    $region40: #{tpu_custom_call.1} parent=1 // pred_region
      %367 = dma.done [#allocation4], 64
    $region41: #{tpu_custom_call.1} parent=1 // pred_fallthru
      _
    %368 = vsyncpa [#allocation3], 1
    %369 = vsyncpa [#allocation6], 1
    %370 = vsyncpa [#allocation4], 1

</llo_original>
